<compile_context>
chip_gen: v5e
topology: v5e:2x2
jax: 0.10.0
libtpu: 0.0.40
codegen_flags: <defaults>
</compile_context>

<pallas_src>
import functools

import jax
import jax.numpy as jnp
from jax import lax
from jax.experimental import pallas as pl
from jax.experimental.pallas import tpu as pltpu


def _sum_all(x):
    # Reduce a 2-D tile to (1, 1) with single-axis reductions (robust lowering).
    return jnp.sum(jnp.sum(x, axis=1, keepdims=True), axis=0, keepdims=True)


def _ulip_loss_kernel(pc_ref, rhs_ref, scale_ref, lab_row_ref, lab_col_ref,
                      out_ref,
                      rhsn_sc,
                      m_pt_sc, s_pt_sc, t_pt_sc,
                      m_pi_sc, s_pi_sc, t_pi_sc,
                      loss_sc,
                      *, mm_dtype):
    i = pl.program_id(0)
    nblk = pl.num_programs(0)
    tm = pc_ref.shape[0]
    B = lab_row_ref.shape[1]

    def l2norm(x):
        return x * lax.rsqrt(jnp.sum(x * x, axis=-1, keepdims=True))

    @pl.when(i == 0)
    def _init():
        # Normalize + cast the resident [text; image] RHS once; later row
        # blocks read the cached copy straight out of VMEM scratch.
        r = rhs_ref[...].astype(jnp.float32)                       # (2B, D)
        rhsn_sc[...] = l2norm(r).astype(mm_dtype)
        for m_sc, s_sc, t_sc in ((m_pt_sc, s_pt_sc, t_pt_sc),
                                 (m_pi_sc, s_pi_sc, t_pi_sc)):
            m_sc[...] = jnp.full_like(m_sc, -jnp.inf)
            s_sc[...] = jnp.zeros_like(s_sc)
            t_sc[...] = jnp.zeros_like(t_sc)
        loss_sc[...] = jnp.zeros_like(loss_sc)

    scale = scale_ref[0, 0]

    # Fold logit_scale into the normalized LHS once (saves 2*B^2 VPU muls).
    pcn = l2norm(pc_ref[...].astype(jnp.float32)) * scale          # (tm, D)

    # Single fused matmul against the cached normalized RHS: contraction on
    # the last dim of BOTH operands, so no transposed RHS copy is ever
    # materialized.  (tm, D) x (2B, D) -> (tm, 2B)
    logits = lax.dot_general(
        pcn.astype(mm_dtype), rhsn_sc[...],
        dimension_numbers=(((1,), (1,)), ((), ())),
        preferred_element_type=jnp.float32)

    lab_c = lab_col_ref[...]                                       # (tm, 1) int32
    lab_r = lab_row_ref[...]                                       # (1, B)  int32
    col_idx = lax.broadcasted_iota(jnp.int32, (tm, B), 1)
    row_idx = lax.broadcasted_iota(jnp.int32, (tm, B), 0) + i * tm
    onehot_row = (col_idx == lab_c).astype(jnp.float32)   # target col of each row
    onehot_col = (row_idx == lab_r).astype(jnp.float32)   # target row of each col

    row_loss = jnp.zeros((1, 1), jnp.float32)
    halves = ((logits[:, :B], m_pt_sc, s_pt_sc, t_pt_sc),
              (logits[:, B:], m_pi_sc, s_pi_sc, t_pi_sc))
    for l_h, m_sc, s_sc, t_sc in halves:
        # ---- row direction (exact: this block holds the full softmax axis) ----
        m_row = jnp.max(l_h, axis=1, keepdims=True)                # (tm, 1)
        e = jnp.exp(l_h - m_row)                                   # single B^2 exp
        lse_row = m_row + jnp.log(jnp.sum(e, axis=1, keepdims=True))
        tgt_row = jnp.sum(l_h * onehot_row, axis=1, keepdims=True)
        row_loss = row_loss + _sum_all(lse_row - tgt_row)

        # ---- column direction: online accumulation across row blocks, ----
        # ---- reusing `e` (no second B^2 exp, no transpose).            ----
        m_col_blk = jnp.max(l_h, axis=0, keepdims=True)            # (1, B)
        m_old = m_sc[...]
        m_new = jnp.maximum(m_old, m_col_blk)
        m_blk = jnp.max(m_row, axis=0, keepdims=True)              # (1, 1) block max
        w_row = jnp.exp(m_row - m_blk)                             # (tm, 1), <= 1
        s_blk = jnp.sum(e * w_row, axis=0, keepdims=True)          # = sum_r exp(l - m_blk)
        # Guard the up-rescale against f32 overflow; the max(s, 1) floor at
        # finalize bounds the (pathological, >80-nat gap) residual error.
        upscale = jnp.exp(jnp.minimum(m_blk - m_new, 80.0))        # (1, B)
        s_sc[...] = s_sc[...] * jnp.exp(m_old - m_new) + s_blk * upscale
        m_sc[...] = m_new
        t_sc[...] = t_sc[...] + jnp.sum(l_h * onehot_col, axis=0, keepdims=True)

    loss_sc[...] = loss_sc[...] + row_loss

    @pl.when(i == nblk - 1)
    def _finalize():
        total = loss_sc[...]
        for m_sc, s_sc, t_sc in ((m_pt_sc, s_pt_sc, t_pt_sc),
                                 (m_pi_sc, s_pi_sc, t_pi_sc)):
            # True column sum >= 1 (the column max contributes exp(0)); the
            # floor guards the shared-exp underflow corner (never hurts).
            lse_col = m_sc[...] + jnp.log(jnp.maximum(s_sc[...], 1.0))
            total = total + _sum_all(lse_col - t_sc[...])
        out_ref[...] = total * (1.0 / (2.0 * B))


def ulip_with_image_loss(pc_embed, text_embed, image_embed, logit_scale, labels,
                         *, block_rows=None):
    B, D = pc_embed.shape
    assert text_embed.shape == (B, D) and image_embed.shape == (B, D)

    if block_rows is None:
        block_rows = B if B <= 256 else 256
    if block_rows != B and (B % block_rows != 0 or block_rows % 8 != 0):
        block_rows = B                        # fall back to a single row block
    tm = block_rows
    nblk = B // tm

    # Wrapper-side layout plumbing: one (2B, D) RHS for the fused matmul, and
    # labels in both lane-dense (1, B) and per-row-block (B, 1) orientations.
    rhs = jnp.concatenate([text_embed, image_embed], axis=0)       # (2B, D)
    scale = jnp.asarray(logit_scale, jnp.float32).reshape(1, 1)
    labels = labels.astype(jnp.int32)
    lab_row = labels.reshape(1, B)
    lab_col = labels.reshape(B, 1)

    mm_dtype = jnp.bfloat16 if pc_embed.dtype == jnp.bfloat16 else jnp.float32
    kernel = functools.partial(_ulip_loss_kernel, mm_dtype=mm_dtype)

    # Rough VMEM footprint -> raise the scoped limit for mid/large shapes.
    in_bytes = jnp.dtype(pc_embed.dtype).itemsize
    mm_bytes = jnp.dtype(mm_dtype).itemsize
    est = (2 * tm * D * in_bytes          # pc row block (double-buffered)
           + 2 * 2 * B * D * in_bytes     # resident RHS input buffers
           + 2 * B * D * mm_bytes         # cached normalized RHS scratch
           + 8 * tm * 2 * B * 4           # logits + intermediates
           + 8 * B * 4 + 4096)
    vmem_limit = max(32 * 1024 * 1024, min(int(1.3 * est), 96 * 1024 * 1024))

    out = pl.pallas_call(
        kernel,
        out_shape=jax.ShapeDtypeStruct((1, 1), jnp.float32),
        grid=(nblk,),
        in_specs=[
            pl.BlockSpec((tm, D), lambda i: (i, 0)),        # pc_embed row block
            pl.BlockSpec((2 * B, D), lambda i: (0, 0)),     # [text; image], resident
            pl.BlockSpec(memory_space=pltpu.SMEM),          # logit_scale (1, 1)
            pl.BlockSpec((1, B), lambda i: (0, 0)),         # labels, lane-dense
            pl.BlockSpec((tm, 1), lambda i: (i, 0)),        # labels, row-block slice
        ],
        out_specs=pl.BlockSpec((1, 1), lambda i: (0, 0)),
        scratch_shapes=[
            pltpu.VMEM((2 * B, D), mm_dtype),   # cached normalized RHS
            pltpu.VMEM((1, B), jnp.float32),    # col max   (pc<->text)
            pltpu.VMEM((1, B), jnp.float32),    # col sum   (pc<->text)
            pltpu.VMEM((1, B), jnp.float32),    # col target(pc<->text)
            pltpu.VMEM((1, B), jnp.float32),    # col max   (pc<->image)
            pltpu.VMEM((1, B), jnp.float32),    # col sum   (pc<->image)
            pltpu.VMEM((1, B), jnp.float32),    # col target(pc<->image)
            pltpu.VMEM((1, 1), jnp.float32),    # row-direction loss accumulator
        ],
        compiler_params=pltpu.CompilerParams(
            dimension_semantics=("arbitrary",),
            vmem_limit_bytes=vmem_limit,
        ),
    )(pc_embed, rhs, scale, lab_row, lab_col)
    return out[0, 0]


def _reference(pc, tx, im, s, labels):
    def l2norm(x):
        return x / jnp.linalg.norm(x, axis=-1, keepdims=True)

    pcn, txn, imn = l2norm(pc), l2norm(tx), l2norm(im)

    def ce(logits, lab):
        logp = jax.nn.log_softmax(logits, axis=-1)
        return -jnp.mean(logp[jnp.arange(logits.shape[0]), lab])

    l_pt = s * pcn @ txn.T
    l_pi = s * pcn @ imn.T
    return (ce(l_pt, labels) + ce(l_pt.T, labels)) / 2 \
         + (ce(l_pi, labels) + ce(l_pi.T, labels)) / 2


if __name__ == "__main__":
    keys = jax.random.split(jax.random.PRNGKey(0), 8)
    logit_scale = jnp.float32(1.0 / 0.07)       # CLIP-style learned scale

    # --- test 1: tiny shape, single row block ---
    B, D = 8, 32
    pc = jax.random.normal(keys[0], (B, D), dtype=jnp.float32)
    tx = jax.random.normal(keys[1], (B, D), dtype=jnp.float32)
    im = jax.random.normal(keys[2], (B, D), dtype=jnp.float32)
    labels = jnp.arange(B, dtype=jnp.int32)
    loss = ulip_with_image_loss(pc, tx, im, logit_scale, labels)
    jax.block_until_ready(loss)
    ref = _reference(pc, tx, im, logit_scale, labels)
    assert jnp.allclose(loss, ref, rtol=1e-3, atol=1e-3), (loss, ref)

    # --- test 2: multi-row-block path (online column-LSE across blocks, ---
    # --- cached-RHS reuse), non-identity labels.                        ---
    B, D = 256, 128
    pc = jax.random.normal(keys[3], (B, D), dtype=jnp.float32)
    tx = jax.random.normal(keys[4], (B, D), dtype=jnp.float32)
    im = jax.random.normal(keys[5], (B, D), dtype=jnp.float32)
    labels = jax.random.permutation(keys[6], jnp.arange(B, dtype=jnp.int32))
    loss = ulip_with_image_loss(pc, tx, im, logit_scale, labels, block_rows=128)
    jax.block_until_ready(loss)
    ref = _reference(pc, tx, im, logit_scale, labels)
    assert jnp.allclose(loss, ref, rtol=1e-3, atol=1e-3), (loss, ref)

    print("KERNEL_OK")
</pallas_src>

<mosaic_0001>
module attributes {stable_mosaic.version = 11 : i64} {
  func.func @_ulip_loss_kernel(%arg0: i32, %arg1: memref<8x32xf32, #tpu.memory_space<vmem>>, %arg2: memref<16x32xf32, #tpu.memory_space<vmem>>, %arg3: memref<1x1xf32, #tpu.memory_space<smem>>, %arg4: memref<1x8xi32, #tpu.memory_space<vmem>>, %arg5: memref<8x1xi32, #tpu.memory_space<vmem>>, %arg6: memref<1x1xf32, #tpu.memory_space<vmem>>, %arg7: memref<16x32xf32, #tpu.memory_space<vmem>>, %arg8: memref<1x8xf32, #tpu.memory_space<vmem>>, %arg9: memref<1x8xf32, #tpu.memory_space<vmem>>, %arg10: memref<1x8xf32, #tpu.memory_space<vmem>>, %arg11: memref<1x8xf32, #tpu.memory_space<vmem>>, %arg12: memref<1x8xf32, #tpu.memory_space<vmem>>, %arg13: memref<1x8xf32, #tpu.memory_space<vmem>>, %arg14: memref<1x1xf32, #tpu.memory_space<vmem>>) attributes {dimension_semantics = [#tpu.dimension_semantics<arbitrary>], iteration_bounds = array<i64: 1>, scalar_prefetch = 0 : i64, scratch_operands = 8 : i64, tpu.core_type = #tpu.core_type<tc>, window_params = [{transform_indices = @transform_0, window_bounds = array<i64: 8, 32>}, {pipeline_mode = #tpu.pipeline_mode<synchronous>, transform_indices = @transform_1, window_bounds = array<i64: 16, 32>}, {transform_indices = @transform_2, window_bounds = array<i64: 1, 1>}, {pipeline_mode = #tpu.pipeline_mode<synchronous>, transform_indices = @transform_3, window_bounds = array<i64: 1, 8>}, {transform_indices = @transform_4, window_bounds = array<i64: 8, 1>}, {pipeline_mode = #tpu.pipeline_mode<synchronous>, transform_indices = @transform_5, window_bounds = array<i64: 1, 1>}]} {
    %c0_i32 = arith.constant 0 : i32
    %0 = arith.cmpi eq, %arg0, %c0_i32 : i32
    %1 = arith.extui %0 : i1 to i32
    %c0_i32_0 = arith.constant 0 : i32
    %2 = arith.cmpi ne, %1, %c0_i32_0 : i32
    scf.if %2 {
      %c0_62 = arith.constant 0 : index
      %c0_63 = arith.constant 0 : index
      %139 = vector.load %arg2[%c0_62, %c0_63] : memref<16x32xf32, #tpu.memory_space<vmem>>, vector<16x32xf32>
      %140 = arith.mulf %139, %139 : vector<16x32xf32>
      %cst_64 = arith.constant dense<0.000000e+00> : vector<16xf32>
      %141 = vector.multi_reduction <add>, %140, %cst_64 [1] : vector<16x32xf32> to vector<16xf32>
      %142 = vector.shape_cast %141 : vector<16xf32> to vector<16x1xf32>
      %143 = math.rsqrt %142 : vector<16x1xf32>
      %144 = vector.broadcast %143 : vector<16x1xf32> to vector<16x32xf32>
      %145 = arith.mulf %139, %144 : vector<16x32xf32>
      %c0_65 = arith.constant 0 : index
      %c0_66 = arith.constant 0 : index
      %146 = vector.load %arg7[%c0_65, %c0_66] : memref<16x32xf32, #tpu.memory_space<vmem>>, vector<16x32xf32>
      tpu.vector_store %arg7[%c0_65, %c0_66], %145 {strides = array<i32>} : memref<16x32xf32, #tpu.memory_space<vmem>>, vector<16x32xf32>,
      %cst_67 = arith.constant 0xFF800000 : f32
      %147 = vector.broadcast %cst_67 : f32 to vector<1x8xf32>
      %c0_68 = arith.constant 0 : index
      %c0_69 = arith.constant 0 : index
      %148 = vector.load %arg8[%c0_68, %c0_69] : memref<1x8xf32, #tpu.memory_space<vmem>>, vector<1x8xf32>
      tpu.vector_store %arg8[%c0_68, %c0_69], %147 {strides = array<i32>} : memref<1x8xf32, #tpu.memory_space<vmem>>, vector<1x8xf32>,
      %cst_70 = arith.constant 0.000000e+00 : f32
      %149 = vector.broadcast %cst_70 : f32 to vector<1x8xf32>
      %c0_71 = arith.constant 0 : index
      %c0_72 = arith.constant 0 : index
      %150 = vector.load %arg9[%c0_71, %c0_72] : memref<1x8xf32, #tpu.memory_space<vmem>>, vector<1x8xf32>
      tpu.vector_store %arg9[%c0_71, %c0_72], %149 {strides = array<i32>} : memref<1x8xf32, #tpu.memory_space<vmem>>, vector<1x8xf32>,
      %cst_73 = arith.constant 0.000000e+00 : f32
      %151 = vector.broadcast %cst_73 : f32 to vector<1x8xf32>
      %c0_74 = arith.constant 0 : index
      %c0_75 = arith.constant 0 : index
      %152 = vector.load %arg10[%c0_74, %c0_75] : memref<1x8xf32, #tpu.memory_space<vmem>>, vector<1x8xf32>
      tpu.vector_store %arg10[%c0_74, %c0_75], %151 {strides = array<i32>} : memref<1x8xf32, #tpu.memory_space<vmem>>, vector<1x8xf32>,
      %cst_76 = arith.constant 0xFF800000 : f32
      %153 = vector.broadcast %cst_76 : f32 to vector<1x8xf32>
      %c0_77 = arith.constant 0 : index
      %c0_78 = arith.constant 0 : index
      %154 = vector.load %arg11[%c0_77, %c0_78] : memref<1x8xf32, #tpu.memory_space<vmem>>, vector<1x8xf32>
      tpu.vector_store %arg11[%c0_77, %c0_78], %153 {strides = array<i32>} : memref<1x8xf32, #tpu.memory_space<vmem>>, vector<1x8xf32>,
      %cst_79 = arith.constant 0.000000e+00 : f32
      %155 = vector.broadcast %cst_79 : f32 to vector<1x8xf32>
      %c0_80 = arith.constant 0 : index
      %c0_81 = arith.constant 0 : index
      %156 = vector.load %arg12[%c0_80, %c0_81] : memref<1x8xf32, #tpu.memory_space<vmem>>, vector<1x8xf32>
      tpu.vector_store %arg12[%c0_80, %c0_81], %155 {strides = array<i32>} : memref<1x8xf32, #tpu.memory_space<vmem>>, vector<1x8xf32>,
      %cst_82 = arith.constant 0.000000e+00 : f32
      %157 = vector.broadcast %cst_82 : f32 to vector<1x8xf32>
      %c0_83 = arith.constant 0 : index
      %c0_84 = arith.constant 0 : index
      %158 = vector.load %arg13[%c0_83, %c0_84] : memref<1x8xf32, #tpu.memory_space<vmem>>, vector<1x8xf32>
      tpu.vector_store %arg13[%c0_83, %c0_84], %157 {strides = array<i32>} : memref<1x8xf32, #tpu.memory_space<vmem>>, vector<1x8xf32>,
      %cst_85 = arith.constant 0.000000e+00 : f32
      %159 = vector.broadcast %cst_85 : f32 to vector<1x1xf32>
      %c0_86 = arith.constant 0 : index
      %c0_87 = arith.constant 0 : index
      %160 = vector.load %arg14[%c0_86, %c0_87] : memref<1x1xf32, #tpu.memory_space<vmem>>, vector<1x1xf32>
      tpu.vector_store %arg14[%c0_86, %c0_87], %159 {strides = array<i32>} : memref<1x1xf32, #tpu.memory_space<vmem>>, vector<1x1xf32>,
    } else {
    }
    %c0 = arith.constant 0 : index
    %c0_1 = arith.constant 0 : index
    %3 = memref.load %arg3[%c0, %c0_1] : memref<1x1xf32, #tpu.memory_space<smem>>
    %c0_2 = arith.constant 0 : index
    %c0_3 = arith.constant 0 : index
    %4 = vector.load %arg1[%c0_2, %c0_3] : memref<8x32xf32, #tpu.memory_space<vmem>>, vector<8x32xf32>
    %5 = arith.mulf %4, %4 : vector<8x32xf32>
    %cst = arith.constant dense<0.000000e+00> : vector<8xf32>
    %6 = vector.multi_reduction <add>, %5, %cst [1] : vector<8x32xf32> to vector<8xf32>
    %7 = vector.shape_cast %6 : vector<8xf32> to vector<8x1xf32>
    %8 = math.rsqrt %7 : vector<8x1xf32>
    %9 = vector.broadcast %8 : vector<8x1xf32> to vector<8x32xf32>
    %10 = arith.mulf %4, %9 : vector<8x32xf32>
    %11 = vector.broadcast %3 : f32 to vector<8x32xf32>
    %12 = arith.mulf %10, %11 : vector<8x32xf32>
    %c0_4 = arith.constant 0 : index
    %c0_5 = arith.constant 0 : index
    %13 = vector.load %arg7[%c0_4, %c0_5] : memref<16x32xf32, #tpu.memory_space<vmem>>, vector<16x32xf32>
    %cst_6 = arith.constant dense<0.000000e+00> : vector<8x16xf32>
    %14 = tpu.matmul %12, %13, %cst_6 {dimension_numbers = #tpu.dot_dimension_numbers<[1], [1], [0], [0], [0, 0, 1, 0], [], []>} : vector<8x32xf32>, vector<16x32xf32>, vector<8x16xf32> -> vector<8x16xf32>
    %c0_7 = arith.constant 0 : index
    %c0_8 = arith.constant 0 : index
    %15 = vector.load %arg5[%c0_7, %c0_8] : memref<8x1xi32, #tpu.memory_space<vmem>>, vector<8x1xi32>
    %c0_9 = arith.constant 0 : index
    %c0_10 = arith.constant 0 : index
    %16 = vector.load %arg4[%c0_9, %c0_10] : memref<1x8xi32, #tpu.memory_space<vmem>>, vector<1x8xi32>
    %17 = tpu.iota {dimensions = array<i32: 1>} : vector<8x8xi32>
    %18 = tpu.iota {dimensions = array<i32: 0>} : vector<8x8xi32>
    %c8_i32 = arith.constant 8 : i32
    %19 = arith.muli %arg0, %c8_i32 : i32
    %20 = vector.broadcast %19 : i32 to vector<8x8xi32>
    %21 = arith.addi %18, %20 : vector<8x8xi32>
    %22 = vector.broadcast %15 : vector<8x1xi32> to vector<8x8xi32>
    %23 = arith.cmpi eq, %17, %22 : vector<8x8xi32>
    %24 = arith.extui %23 : vector<8x8xi1> to vector<8x8xi32>
    %25 = arith.sitofp %24 : vector<8x8xi32> to vector<8x8xf32>
    %26 = vector.broadcast %16 : vector<1x8xi32> to vector<8x8xi32>
    %27 = arith.cmpi eq, %21, %26 : vector<8x8xi32>
    %28 = arith.extui %27 : vector<8x8xi1> to vector<8x8xi32>
    %29 = arith.sitofp %28 : vector<8x8xi32> to vector<8x8xf32>
    %cst_11 = arith.constant 0.000000e+00 : f32
    %30 = vector.broadcast %cst_11 : f32 to vector<1x1xf32>
    %31 = vector.extract_strided_slice %14 {offsets = [0, 0], sizes = [8, 8], strides = [1, 1]} : vector<8x16xf32> to vector<8x8xf32>
    %32 = vector.extract_strided_slice %14 {offsets = [0, 8], sizes = [8, 8], strides = [1, 1]} : vector<8x16xf32> to vector<8x8xf32>
    %cst_12 = arith.constant dense<0xFF800000> : vector<8xf32>
    %33 = vector.multi_reduction <maximumf>, %31, %cst_12 [1] : vector<8x8xf32> to vector<8xf32>
    %34 = vector.shape_cast %33 : vector<8xf32> to vector<8x1xf32>
    %35 = vector.broadcast %34 : vector<8x1xf32> to vector<8x8xf32>
    %36 = arith.subf %31, %35 : vector<8x8xf32>
    %37 = math.exp %36 : vector<8x8xf32>
    %cst_13 = arith.constant dense<0.000000e+00> : vector<8xf32>
    %38 = vector.multi_reduction <add>, %37, %cst_13 [1] : vector<8x8xf32> to vector<8xf32>
    %39 = vector.shape_cast %38 : vector<8xf32> to vector<8x1xf32>
    %40 = math.log %39 : vector<8x1xf32>
    %41 = arith.addf %34, %40 : vector<8x1xf32>
    %42 = arith.mulf %31, %25 : vector<8x8xf32>
    %cst_14 = arith.constant dense<0.000000e+00> : vector<8xf32>
    %43 = vector.multi_reduction <add>, %42, %cst_14 [1] : vector<8x8xf32> to vector<8xf32>
    %44 = vector.shape_cast %43 : vector<8xf32> to vector<8x1xf32>
    %45 = arith.subf %41, %44 : vector<8x1xf32>
    %cst_15 = arith.constant dense<0.000000e+00> : vector<8xf32>
    %46 = vector.multi_reduction <add>, %45, %cst_15 [1] : vector<8x1xf32> to vector<8xf32>
    %47 = vector.shape_cast %46 : vector<8xf32> to vector<8x1xf32>
    %cst_16 = arith.constant dense<0.000000e+00> : vector<1xf32>
    %48 = vector.multi_reduction <add>, %47, %cst_16 [0] : vector<8x1xf32> to vector<1xf32>
    %49 = vector.shape_cast %48 : vector<1xf32> to vector<1x1xf32>
    %50 = arith.addf %30, %49 : vector<1x1xf32>
    %cst_17 = arith.constant dense<0xFF800000> : vector<8xf32>
    %51 = vector.multi_reduction <maximumf>, %31, %cst_17 [0] : vector<8x8xf32> to vector<8xf32>
    %52 = vector.shape_cast %51 : vector<8xf32> to vector<1x8xf32>
    %c0_18 = arith.constant 0 : index
    %c0_19 = arith.constant 0 : index
    %53 = vector.load %arg8[%c0_18, %c0_19] : memref<1x8xf32, #tpu.memory_space<vmem>>, vector<1x8xf32>
    %54 = arith.maximumf %53, %52 : vector<1x8xf32>
    %cst_20 = arith.constant dense<0xFF800000> : vector<1xf32>
    %55 = vector.multi_reduction <maximumf>, %34, %cst_20 [0] : vector<8x1xf32> to vector<1xf32>
    %56 = vector.shape_cast %55 : vector<1xf32> to vector<1x1xf32>
    %57 = vector.broadcast %56 : vector<1x1xf32> to vector<8x1xf32>
    %58 = arith.subf %34, %57 : vector<8x1xf32>
    %59 = math.exp %58 : vector<8x1xf32>
    %60 = vector.broadcast %59 : vector<8x1xf32> to vector<8x8xf32>
    %61 = arith.mulf %37, %60 : vector<8x8xf32>
    %cst_21 = arith.constant dense<0.000000e+00> : vector<8xf32>
    %62 = vector.multi_reduction <add>, %61, %cst_21 [0] : vector<8x8xf32> to vector<8xf32>
    %63 = vector.shape_cast %62 : vector<8xf32> to vector<1x8xf32>
    %64 = vector.broadcast %56 : vector<1x1xf32> to vector<1x8xf32>
    %65 = arith.subf %64, %54 : vector<1x8xf32>
    %cst_22 = arith.constant 8.000000e+01 : f32
    %66 = vector.broadcast %cst_22 : f32 to vector<1x8xf32>
    %67 = arith.minimumf %65, %66 : vector<1x8xf32>
    %68 = math.exp %67 : vector<1x8xf32>
    %c0_23 = arith.constant 0 : index
    %c0_24 = arith.constant 0 : index
    %69 = vector.load %arg9[%c0_23, %c0_24] : memref<1x8xf32, #tpu.memory_space<vmem>>, vector<1x8xf32>
    %70 = arith.subf %53, %54 : vector<1x8xf32>
    %71 = math.exp %70 : vector<1x8xf32>
    %72 = arith.mulf %69, %71 : vector<1x8xf32>
    %73 = arith.mulf %63, %68 : vector<1x8xf32>
    %74 = arith.addf %72, %73 : vector<1x8xf32>
    %c0_25 = arith.constant 0 : index
    %c0_26 = arith.constant 0 : index
    %75 = vector.load %arg9[%c0_25, %c0_26] : memref<1x8xf32, #tpu.memory_space<vmem>>, vector<1x8xf32>
    tpu.vector_store %arg9[%c0_25, %c0_26], %74 {strides = array<i32>} : memref<1x8xf32, #tpu.memory_space<vmem>>, vector<1x8xf32>,
    %c0_27 = arith.constant 0 : index
    %c0_28 = arith.constant 0 : index
    %76 = vector.load %arg8[%c0_27, %c0_28] : memref<1x8xf32, #tpu.memory_space<vmem>>, vector<1x8xf32>
    tpu.vector_store %arg8[%c0_27, %c0_28], %54 {strides = array<i32>} : memref<1x8xf32, #tpu.memory_space<vmem>>, vector<1x8xf32>,
    %c0_29 = arith.constant 0 : index
    %c0_30 = arith.constant 0 : index
    %77 = vector.load %arg10[%c0_29, %c0_30] : memref<1x8xf32, #tpu.memory_space<vmem>>, vector<1x8xf32>
    %78 = arith.mulf %31, %29 : vector<8x8xf32>
    %cst_31 = arith.constant dense<0.000000e+00> : vector<8xf32>
    %79 = vector.multi_reduction <add>, %78, %cst_31 [0] : vector<8x8xf32> to vector<8xf32>
    %80 = vector.shape_cast %79 : vector<8xf32> to vector<1x8xf32>
    %81 = arith.addf %77, %80 : vector<1x8xf32>
    %c0_32 = arith.constant 0 : index
    %c0_33 = arith.constant 0 : index
    %82 = vector.load %arg10[%c0_32, %c0_33] : memref<1x8xf32, #tpu.memory_space<vmem>>, vector<1x8xf32>
    tpu.vector_store %arg10[%c0_32, %c0_33], %81 {strides = array<i32>} : memref<1x8xf32, #tpu.memory_space<vmem>>, vector<1x8xf32>,
    %cst_34 = arith.constant dense<0xFF800000> : vector<8xf32>
    %83 = vector.multi_reduction <maximumf>, %32, %cst_34 [1] : vector<8x8xf32> to vector<8xf32>
    %84 = vector.shape_cast %83 : vector<8xf32> to vector<8x1xf32>
    %85 = vector.broadcast %84 : vector<8x1xf32> to vector<8x8xf32>
    %86 = arith.subf %32, %85 : vector<8x8xf32>
    %87 = math.exp %86 : vector<8x8xf32>
    %cst_35 = arith.constant dense<0.000000e+00> : vector<8xf32>
    %88 = vector.multi_reduction <add>, %87, %cst_35 [1] : vector<8x8xf32> to vector<8xf32>
    %89 = vector.shape_cast %88 : vector<8xf32> to vector<8x1xf32>
    %90 = math.log %89 : vector<8x1xf32>
    %91 = arith.addf %84, %90 : vector<8x1xf32>
    %92 = arith.mulf %32, %25 : vector<8x8xf32>
    %cst_36 = arith.constant dense<0.000000e+00> : vector<8xf32>
    %93 = vector.multi_reduction <add>, %92, %cst_36 [1] : vector<8x8xf32> to vector<8xf32>
    %94 = vector.shape_cast %93 : vector<8xf32> to vector<8x1xf32>
    %95 = arith.subf %91, %94 : vector<8x1xf32>
    %cst_37 = arith.constant dense<0.000000e+00> : vector<8xf32>
    %96 = vector.multi_reduction <add>, %95, %cst_37 [1] : vector<8x1xf32> to vector<8xf32>
    %97 = vector.shape_cast %96 : vector<8xf32> to vector<8x1xf32>
    %cst_38 = arith.constant dense<0.000000e+00> : vector<1xf32>
    %98 = vector.multi_reduction <add>, %97, %cst_38 [0] : vector<8x1xf32> to vector<1xf32>
    %99 = vector.shape_cast %98 : vector<1xf32> to vector<1x1xf32>
    %100 = arith.addf %50, %99 : vector<1x1xf32>
    %cst_39 = arith.constant dense<0xFF800000> : vector<8xf32>
    %101 = vector.multi_reduction <maximumf>, %32, %cst_39 [0] : vector<8x8xf32> to vector<8xf32>
    %102 = vector.shape_cast %101 : vector<8xf32> to vector<1x8xf32>
    %c0_40 = arith.constant 0 : index
    %c0_41 = arith.constant 0 : index
    %103 = vector.load %arg11[%c0_40, %c0_41] : memref<1x8xf32, #tpu.memory_space<vmem>>, vector<1x8xf32>
    %104 = arith.maximumf %103, %102 : vector<1x8xf32>
    %cst_42 = arith.constant dense<0xFF800000> : vector<1xf32>
    %105 = vector.multi_reduction <maximumf>, %84, %cst_42 [0] : vector<8x1xf32> to vector<1xf32>
    %106 = vector.shape_cast %105 : vector<1xf32> to vector<1x1xf32>
    %107 = vector.broadcast %106 : vector<1x1xf32> to vector<8x1xf32>
    %108 = arith.subf %84, %107 : vector<8x1xf32>
    %109 = math.exp %108 : vector<8x1xf32>
    %110 = vector.broadcast %109 : vector<8x1xf32> to vector<8x8xf32>
    %111 = arith.mulf %87, %110 : vector<8x8xf32>
    %cst_43 = arith.constant dense<0.000000e+00> : vector<8xf32>
    %112 = vector.multi_reduction <add>, %111, %cst_43 [0] : vector<8x8xf32> to vector<8xf32>
    %113 = vector.shape_cast %112 : vector<8xf32> to vector<1x8xf32>
    %114 = vector.broadcast %106 : vector<1x1xf32> to vector<1x8xf32>
    %115 = arith.subf %114, %104 : vector<1x8xf32>
    %cst_44 = arith.constant 8.000000e+01 : f32
    %116 = vector.broadcast %cst_44 : f32 to vector<1x8xf32>
    %117 = arith.minimumf %115, %116 : vector<1x8xf32>
    %118 = math.exp %117 : vector<1x8xf32>
    %c0_45 = arith.constant 0 : index
    %c0_46 = arith.constant 0 : index
    %119 = vector.load %arg12[%c0_45, %c0_46] : memref<1x8xf32, #tpu.memory_space<vmem>>, vector<1x8xf32>
    %120 = arith.subf %103, %104 : vector<1x8xf32>
    %121 = math.exp %120 : vector<1x8xf32>
    %122 = arith.mulf %119, %121 : vector<1x8xf32>
    %123 = arith.mulf %113, %118 : vector<1x8xf32>
    %124 = arith.addf %122, %123 : vector<1x8xf32>
    %c0_47 = arith.constant 0 : index
    %c0_48 = arith.constant 0 : index
    %125 = vector.load %arg12[%c0_47, %c0_48] : memref<1x8xf32, #tpu.memory_space<vmem>>, vector<1x8xf32>
    tpu.vector_store %arg12[%c0_47, %c0_48], %124 {strides = array<i32>} : memref<1x8xf32, #tpu.memory_space<vmem>>, vector<1x8xf32>,
    %c0_49 = arith.constant 0 : index
    %c0_50 = arith.constant 0 : index
    %126 = vector.load %arg11[%c0_49, %c0_50] : memref<1x8xf32, #tpu.memory_space<vmem>>, vector<1x8xf32>
    tpu.vector_store %arg11[%c0_49, %c0_50], %104 {strides = array<i32>} : memref<1x8xf32, #tpu.memory_space<vmem>>, vector<1x8xf32>,
    %c0_51 = arith.constant 0 : index
    %c0_52 = arith.constant 0 : index
    %127 = vector.load %arg13[%c0_51, %c0_52] : memref<1x8xf32, #tpu.memory_space<vmem>>, vector<1x8xf32>
    %128 = arith.mulf %32, %29 : vector<8x8xf32>
    %cst_53 = arith.constant dense<0.000000e+00> : vector<8xf32>
    %129 = vector.multi_reduction <add>, %128, %cst_53 [0] : vector<8x8xf32> to vector<8xf32>
    %130 = vector.shape_cast %129 : vector<8xf32> to vector<1x8xf32>
    %131 = arith.addf %127, %130 : vector<1x8xf32>
    %c0_54 = arith.constant 0 : index
    %c0_55 = arith.constant 0 : index
    %132 = vector.load %arg13[%c0_54, %c0_55] : memref<1x8xf32, #tpu.memory_space<vmem>>, vector<1x8xf32>
    tpu.vector_store %arg13[%c0_54, %c0_55], %131 {strides = array<i32>} : memref<1x8xf32, #tpu.memory_space<vmem>>, vector<1x8xf32>,
    %c0_56 = arith.constant 0 : index
    %c0_57 = arith.constant 0 : index
    %133 = vector.load %arg14[%c0_56, %c0_57] : memref<1x1xf32, #tpu.memory_space<vmem>>, vector<1x1xf32>
    %134 = arith.addf %133, %100 : vector<1x1xf32>
    %c0_58 = arith.constant 0 : index
    %c0_59 = arith.constant 0 : index
    %135 = vector.load %arg14[%c0_58, %c0_59] : memref<1x1xf32, #tpu.memory_space<vmem>>, vector<1x1xf32>
    tpu.vector_store %arg14[%c0_58, %c0_59], %134 {strides = array<i32>} : memref<1x1xf32, #tpu.memory_space<vmem>>, vector<1x1xf32>,
    %c0_i32_60 = arith.constant 0 : i32
    %136 = arith.cmpi eq, %arg0, %c0_i32_60 : i32
    %137 = arith.extui %136 : i1 to i32
    %c0_i32_61 = arith.constant 0 : i32
    %138 = arith.cmpi ne, %137, %c0_i32_61 : i32
    scf.if %138 {
      %c0_62 = arith.constant 0 : index
      %c0_63 = arith.constant 0 : index
      %139 = vector.load %arg14[%c0_62, %c0_63] : memref<1x1xf32, #tpu.memory_space<vmem>>, vector<1x1xf32>
      %c0_64 = arith.constant 0 : index
      %c0_65 = arith.constant 0 : index
      %140 = vector.load %arg8[%c0_64, %c0_65] : memref<1x8xf32, #tpu.memory_space<vmem>>, vector<1x8xf32>
      %c0_66 = arith.constant 0 : index
      %c0_67 = arith.constant 0 : index
      %141 = vector.load %arg9[%c0_66, %c0_67] : memref<1x8xf32, #tpu.memory_space<vmem>>, vector<1x8xf32>
      %cst_68 = arith.constant 1.000000e+00 : f32
      %142 = vector.broadcast %cst_68 : f32 to vector<1x8xf32>
      %143 = arith.maximumf %141, %142 : vector<1x8xf32>
      %144 = math.log %143 : vector<1x8xf32>
      %145 = arith.addf %140, %144 : vector<1x8xf32>
      %c0_69 = arith.constant 0 : index
      %c0_70 = arith.constant 0 : index
      %146 = vector.load %arg10[%c0_69, %c0_70] : memref<1x8xf32, #tpu.memory_space<vmem>>, vector<1x8xf32>
      %147 = arith.subf %145, %146 : vector<1x8xf32>
      %cst_71 = arith.constant dense<0.000000e+00> : vector<1xf32>
      %148 = vector.multi_reduction <add>, %147, %cst_71 [1] : vector<1x8xf32> to vector<1xf32>
      %149 = vector.shape_cast %148 : vector<1xf32> to vector<1x1xf32>
      %cst_72 = arith.constant dense<0.000000e+00> : vector<1xf32>
      %150 = vector.multi_reduction <add>, %149, %cst_72 [0] : vector<1x1xf32> to vector<1xf32>
      %151 = vector.shape_cast %150 : vector<1xf32> to vector<1x1xf32>
      %152 = arith.addf %139, %151 : vector<1x1xf32>
      %c0_73 = arith.constant 0 : index
      %c0_74 = arith.constant 0 : index
      %153 = vector.load %arg11[%c0_73, %c0_74] : memref<1x8xf32, #tpu.memory_space<vmem>>, vector<1x8xf32>
      %c0_75 = arith.constant 0 : index
      %c0_76 = arith.constant 0 : index
      %154 = vector.load %arg12[%c0_75, %c0_76] : memref<1x8xf32, #tpu.memory_space<vmem>>, vector<1x8xf32>
      %cst_77 = arith.constant 1.000000e+00 : f32
      %155 = vector.broadcast %cst_77 : f32 to vector<1x8xf32>
      %156 = arith.maximumf %154, %155 : vector<1x8xf32>
      %157 = math.log %156 : vector<1x8xf32>
      %158 = arith.addf %153, %157 : vector<1x8xf32>
      %c0_78 = arith.constant 0 : index
      %c0_79 = arith.constant 0 : index
      %159 = vector.load %arg13[%c0_78, %c0_79] : memref<1x8xf32, #tpu.memory_space<vmem>>, vector<1x8xf32>
      %160 = arith.subf %158, %159 : vector<1x8xf32>
      %cst_80 = arith.constant dense<0.000000e+00> : vector<1xf32>
      %161 = vector.multi_reduction <add>, %160, %cst_80 [1] : vector<1x8xf32> to vector<1xf32>
      %162 = vector.shape_cast %161 : vector<1xf32> to vector<1x1xf32>
      %cst_81 = arith.constant dense<0.000000e+00> : vector<1xf32>
      %163 = vector.multi_reduction <add>, %162, %cst_81 [0] : vector<1x1xf32> to vector<1xf32>
      %164 = vector.shape_cast %163 : vector<1xf32> to vector<1x1xf32>
      %165 = arith.addf %152, %164 : vector<1x1xf32>
      %cst_82 = arith.constant 6.250000e-02 : f32
      %166 = vector.broadcast %cst_82 : f32 to vector<1x1xf32>
      %167 = arith.mulf %165, %166 : vector<1x1xf32>
      %c0_83 = arith.constant 0 : index
      %c0_84 = arith.constant 0 : index
      %168 = vector.load %arg6[%c0_83, %c0_84] : memref<1x1xf32, #tpu.memory_space<vmem>>, vector<1x1xf32>
      tpu.vector_store %arg6[%c0_83, %c0_84], %167 {strides = array<i32>} : memref<1x1xf32, #tpu.memory_space<vmem>>, vector<1x1xf32>,
    } else {
    }
    return
  }
  func.func @transform_0(%arg0: i32) -> (i32, i32) {
    %c0_i32 = arith.constant 0 : i32
    %c0_i32_0 = arith.constant 0 : i32
    return %arg0, %c0_i32 : i32, i32
  }
  func.func @transform_1(%arg0: i32) -> (i32, i32) {
    %c0_i32 = arith.constant 0 : i32
    %c0_i32_0 = arith.constant 0 : i32
    %c0_i32_1 = arith.constant 0 : i32
    return %c0_i32, %c0_i32_0 : i32, i32
  }
  func.func @transform_2(%arg0: i32) -> (i32, i32) {
    %c0_i32 = arith.constant 0 : i32
    %c0_i32_0 = arith.constant 0 : i32
    %c0_i32_1 = arith.constant 0 : i32
    return %c0_i32, %c0_i32_0 : i32, i32
  }
  func.func @transform_3(%arg0: i32) -> (i32, i32) {
    %c0_i32 = arith.constant 0 : i32
    %c0_i32_0 = arith.constant 0 : i32
    %c0_i32_1 = arith.constant 0 : i32
    return %c0_i32, %c0_i32_0 : i32, i32
  }
  func.func @transform_4(%arg0: i32) -> (i32, i32) {
    %c0_i32 = arith.constant 0 : i32
    %c0_i32_0 = arith.constant 0 : i32
    return %arg0, %c0_i32 : i32, i32
  }
  func.func @transform_5(%arg0: i32) -> (i32, i32) {
    %c0_i32 = arith.constant 0 : i32
    %c0_i32_0 = arith.constant 0 : i32
    %c0_i32_1 = arith.constant 0 : i32
    return %c0_i32, %c0_i32_0 : i32, i32
  }
}

</mosaic_0001>

<llo_original>
// kernel: tpu_custom_call.1
$region0: #{tpu_custom_call.1}
  #allocation0 [shape = 'u32[]', space=smem, size = 0x4, offset = 0x4, fixed_abs, tag = 'smem constant byte address 0x4 - core index']
  #allocation1 [shape = 'u32[72,128]{1,0:T(1,128)}', space=vmem, size = 0x9000, scoped, tag = 'internal scratch']
  #allocation2 [shape = 'f32[16,32]{1,0:T(8,128)}', space=vmem, size = 0x2000, scoped, tag = 'scratch operand']
  #allocation3 [shape = 'f32[1,8]{1,0:T(1,128)}', space=vmem, size = 0x200, scoped, tag = 'scratch operand']
  #allocation4 [shape = 'f32[1,8]{1,0:T(1,128)}', space=vmem, size = 0x200, scoped, tag = 'scratch operand']
  #allocation5 [shape = 'f32[1,8]{1,0:T(1,128)}', space=vmem, size = 0x200, scoped, tag = 'scratch operand']
  #allocation6 [shape = 'f32[1,8]{1,0:T(1,128)}', space=vmem, size = 0x200, scoped, tag = 'scratch operand']
  #allocation7 [shape = 'f32[1,8]{1,0:T(1,128)}', space=vmem, size = 0x200, scoped, tag = 'scratch operand']
  #allocation8 [shape = 'f32[1,8]{1,0:T(1,128)}', space=vmem, size = 0x200, scoped, tag = 'scratch operand']
  #allocation9 [shape = 'f32[1,1]{1,0:T(1,128)}', space=vmem, size = 0x200, scoped, tag = 'scratch operand']
  #allocation10 [shape = 'f32[1,1]{1,0:T(1,128)S(6)}', space=smem, size = 0x200, scoped, tag = 'scoped memory for tpu_custom_call.1']
  %s0 = inlined_call_operand.vmem [shape: f32[8,32], index: 0, kind: input, shape index: {}]
  %s1 = inlined_call_operand.hbm [shape: f32[16,32], index: 1, kind: input, shape index: {}]
  %s2 = inlined_call_operand.<no memory space> [shape: f32[1,1], index: 2, kind: input, shape index: {}]
  %s3 = inlined_call_operand.vmem [shape: s32[1,8], index: 3, kind: input, shape index: {}]
  %s4 = inlined_call_operand.vmem [shape: s32[8,1], index: 4, kind: input, shape index: {}]
  %s5 = inlined_call_operand.hbm [shape: f32[1,1], index: 5, kind: output, shape index: {}]
  %s6 = sld [smem:[#allocation0]]
  $region42: #{tpu_custom_call.1} parent=0
    _
  %s8 = ssub.s32 1, %s6
  %s9 = scalar_select 0, %s8, %s6
  %10 = sst [smem:[#allocation10]] %s2
  $region1: #{tpu_custom_call.1} parent=0
    #allocation11 [shape = 'u8[8192]{0}', space=vmem, size = 0x2000, scoped, tag = 'input window, operand 1, single buffered']
    #allocation12 [shape = 's32[1]{0}', space=sflag, size = 0x4, scoped, tag = 'scoped memory for tpu_custom_call.1']
    #allocation13 [shape = 's32[1]{0}', space=sflag, size = 0x4, scoped, tag = 'scoped memory for tpu_custom_call.1']
    #allocation14 [shape = 'u8[512]{0}', space=vmem, size = 0x400, scoped, tag = 'output window, operand 0, single buffered']
    %11 = vsyncpa [#allocation12], 0
    %12 = vsyncpa [#allocation13], 0
    // Predicated region
    $region2: #{tpu_custom_call.1} parent=1 // pred_check
      _
    $region3: #{tpu_custom_call.1} parent=1 // pred_check_branch
      %14 = sbr.rel (0) target = $region5
    $region4: #{tpu_custom_call.1} parent=1 // pred_region
      _
    $region5: #{tpu_custom_call.1} parent=1 // pred_fallthru
      _
    // Predicated region
    $region6: #{tpu_custom_call.1} parent=1 // pred_check
      _
    $region7: #{tpu_custom_call.1} parent=1 // pred_check_branch
      %16 = sbr.rel (0) target = $region9
    $region8: #{tpu_custom_call.1} parent=1 // pred_region
      %18 = vsyncadd [#allocation12], 0
      %s19 = sshll.u32 %s1, 4
      %s20 = int_to_ptr.hbm [resolvable:$true] %s19
      %s21 = sshll.u32 [#allocation11], 4
      %s22 = int_to_ptr.vmem [resolvable:$true] %s21
      %27 = dma.hbm_to_vmem [thread:$0]  %s20, 256, %s22, [#allocation12], 128, 128, 8
    $region9: #{tpu_custom_call.1} parent=1 // pred_fallthru
      _
    // Predicated region
    $region10: #{tpu_custom_call.1} parent=1 // pred_check
      _
    $region11: #{tpu_custom_call.1} parent=1 // pred_check_branch
      %29 = sbr.rel (0) target = $region13
    $region12: #{tpu_custom_call.1} parent=1 // pred_region
      _
    $region13: #{tpu_custom_call.1} parent=1 // pred_fallthru
      _
    // Predicated region
    $region14: #{tpu_custom_call.1} parent=1 // pred_check
      _
    $region15: #{tpu_custom_call.1} parent=1 // pred_check_branch
      %31 = sbr.rel (0) target = $region17
    $region16: #{tpu_custom_call.1} parent=1 // pred_region
      _
    $region17: #{tpu_custom_call.1} parent=1 // pred_fallthru
      _
    // Predicated region
    $region18: #{tpu_custom_call.1} parent=1 // pred_check
      _
    $region19: #{tpu_custom_call.1} parent=1 // pred_check_branch
      %33 = sbr.rel (0) target = $region21
    $region20: #{tpu_custom_call.1} parent=1 // pred_region
      _
    $region21: #{tpu_custom_call.1} parent=1 // pred_fallthru
      _
    // Predicated region
    $region22: #{tpu_custom_call.1} parent=1 // pred_check
      _
    $region23: #{tpu_custom_call.1} parent=1 // pred_check_branch
      %35 = sbr.rel (0) target = $region25
    $region24: #{tpu_custom_call.1} parent=1 // pred_region
      %37 = dma.done [#allocation12], 256
    $region25: #{tpu_custom_call.1} parent=1 // pred_fallthru
      _
    %p38 = scmp.eq.s32.totalorder 0, 0
    // Predicated region
    $region26: #{tpu_custom_call.1} parent=1 // pred_check
      %p39 = pneg %p38
    $region27: #{tpu_custom_call.1} parent=1 // pred_check_branch
      %41 = sbr.rel (%p39) target = $region29
    $region28: #{tpu_custom_call.1} parent=1 // pred_region
      %v42 = vld [vmem:[#allocation11] sm:$0xff]
      %v43 = vld [vmem:[#allocation11 + $0x8] sm:$0xff]
      %v44 = vmul.f32 %v42, %v42
      %v45 = vmul.f32 %v43, %v43
      %vm46 = vcmask 261120
      %v47 = vsel %vm46, %v44, 0.0
      %48 = vadd.xlane.f32.xlu0 %v47
      %v49 = vpop.xlane.xlu0 %48
      %v50 = vsel %vm46, %v45, 0.0
      %51 = vadd.xlane.f32.xlu0 %v50
      %v52 = vpop.xlane.xlu0 %51
      %v53 = vrsqrt.pop %v49
      %v54 = vmul.f32 %v53, %v49
      %v55 = vmul.f32 %v54, %v53
      %v56 = vmul.f32 0.5, %v55
      %v57 = vsub.f32 1.5, %v56
      %v58 = vmul.f32 %v53, %v57
      %vm59 = vweird.f32 %v49
      %vm60 = vweird.f32 %v53
      %vm61 = vmor %vm59, %vm60
      %v62 = vsel %vm61, %v53, %v58
      %v63 = vrsqrt.pop %v52
      %v64 = vmul.f32 %v63, %v52
      %v65 = vmul.f32 %v64, %v63
      %v66 = vmul.f32 0.5, %v65
      %v67 = vsub.f32 1.5, %v66
      %v68 = vmul.f32 %v63, %v67
      %vm69 = vweird.f32 %v52
      %vm70 = vweird.f32 %v63
      %vm71 = vmor %vm69, %vm70
      %v72 = vsel %vm71, %v63, %v68
      %v73 = vmul.f32 %v42, %v62
      %v74 = vmul.f32 %v43, %v72
      %75 = vst.msk [vmem:[#allocation2] sm:$0xff] %vm46, %v73
      %76 = vst.msk [vmem:[#allocation2 + $0x8] sm:$0xff] %vm46, %v74
      %vm77 = vcmask 57344
      %78 = vst.msk [vmem:[#allocation3] sm:$0x1] %vm77, -inf
      %79 = vst.msk [vmem:[#allocation4] sm:$0x1] %vm77, 0.0
      %80 = vst.msk [vmem:[#allocation5] sm:$0x1] %vm77, 0.0
      %81 = vst.msk [vmem:[#allocation6] sm:$0x1] %vm77, -inf
      %82 = vst.msk [vmem:[#allocation7] sm:$0x1] %vm77, 0.0
      %83 = vst.msk [vmem:[#allocation8] sm:$0x1] %vm77, 0.0
      %vm84 = vcmask 0
      %85 = vst.msk [vmem:[#allocation9] sm:$0x1] %vm84, 0.0
    $region29: #{tpu_custom_call.1} parent=1 // pred_fallthru
      _
    %s86 = sld [smem:[#allocation10]]
    %v87 = vld [vmem:[%s0] sm:$0xff]
    %v88 = vmul.f32 %v87, %v87
    %vm89 = vcmask 261120
    %v90 = vsel %vm89, %v88, 0.0
    %91 = vadd.xlane.f32.xlu0 %v90
    %v92 = vpop.xlane.xlu0 %91
    %v93 = vrsqrt.pop %v92
    %v94 = vmul.f32 %v93, %v92
    %v95 = vmul.f32 %v94, %v93
    %v96 = vmul.f32 0.5, %v95
    %v97 = vsub.f32 1.5, %v96
    %v98 = vmul.f32 %v93, %v97
    %vm99 = vweird.f32 %v92
    %vm100 = vweird.f32 %v93
    %vm101 = vmor %vm99, %vm100
    %v102 = vsel %vm101, %v93, %v98
    %v103 = vmul.f32 %v87, %v102
    %v104 = vstv %s86
    %v105 = vmul.f32 %v103, %v104
    %v106 = vld [vmem:[#allocation2] sm:$0xff]
    %v107 = vld [vmem:[#allocation2 + $0x8] sm:$0xff]
    %v109 = vsel %vm89, %v105, 0
    %v112 = vsel %vm89, %v106, 0
    %v115 = vsel %vm89, %v107, 0
    %117 = vmatpush.xpose.msra.mxu0 0.0
    %118 = vmatpush.xpose.msra.mxu0 0.0
    %119 = vmatpush.xpose.msra.mxu0 0.0
    %120 = vmatpush.xpose.msra.mxu0 0.0
    %121 = vmatpush.xpose.msra.mxu0 0.0
    %122 = vmatpush.xpose.msra.mxu0 0.0
    %123 = vmatpush.xpose.msra.mxu0 0.0
    %124 = vmatpush.xpose.msra.mxu0 0.0
    %125 = vmatpush.xpose.msra.mxu0 0.0
    %126 = vmatpush.xpose.msra.mxu0 0.0
    %127 = vmatpush.xpose.msra.mxu0 0.0
    %128 = vmatpush.xpose.msra.mxu0 0.0
    %129 = vmatpush.xpose.msra.mxu0 0.0
    %130 = vmatpush.xpose.msra.mxu0 0.0
    %131 = vmatpush.xpose.msra.mxu0 %v115
    %132 = vmatpush.xpose.msra.mxu0 %v112
    %133 = vmatmul.f32.gmra.mxu0 %v109
    %v134 = vpop.f32.mrf.mxu0
    %v135 = vadd.f32 0.0, %v134
    %136 = vdwg.mxu0
    %v137 = vld [vmem:[%s4] sm:$0xff]
    %v138 = vld [vmem:[%s3] sm:$0x1]
    %v139 = vlaneseq
    %v140 = vand.u32 %v139, 127
    %v141 = vlaneseq
    %v142 = vshrl.u32 %v141, 7
    %s143 = smul.u32 0, 8
    %v144 = vstv %s143
    %v145 = vadd.s32 %v142, %v144
    %146 = vset.pattern.permute.xlu0 0
    %147 = vperm.xlu0 %146, %v137
    %v148 = vpop.permute.xlu0 %147
    %vm149 = vcmp.eq.s32.totalorder %v140, %v148
    %v150 = vsel %vm149, 1, 0
    %v151 = vcvt.s32.f32 %v150
    %v152 = vperm.slane %v138, 0
    %vm153 = vcmp.eq.s32.totalorder %v145, %v152
    %v154 = vsel %vm153, 1, 0
    %v155 = vcvt.s32.f32 %v154
    %vm156 = vcmask 64512
    %v157 = vsel %vm156, %v135, -inf
    %158 = vmax.xlane.f32.xlu0 %v157
    %v159 = vpop.xlane.xlu0 %158
    %v160 = vsub.f32 %v135, %v159
    %v161 = vmul.f32 %v160, 1.442695
    %v162 = vpow.pop %v161
    %v163 = vsel %vm156, %v162, 0.0
    %164 = vadd.xlane.f32.xlu0 %v163
    %v165 = vpop.xlane.xlu0 %164
    %v166 = vlog2.pop %v165
    %v167 = vmul.f32 %v166, 0.6931472
    %v168 = vadd.f32 %v159, %v167
    %v169 = vmul.f32 %v135, %v151
    %v170 = vsel %vm156, %v169, 0.0
    %171 = vadd.xlane.f32.xlu0 %v170
    %v172 = vpop.xlane.xlu0 %171
    %v173 = vsub.f32 %v168, %v172
    %v174 = vadd.f32 %v173, 0.0
    %v175 = vrot.slane %v174, 4
    %v176 = vadd.f32 %v174, %v175
    %v177 = vrot.slane %v176, 2
    %v178 = vadd.f32 %v176, %v177
    %v179 = vrot.slane %v178, 1
    %v180 = vadd.f32 %v178, %v179
    %v181 = vadd.f32 %v180, 0.0
    %v182 = vrot.slane %v157, 4
    %v183 = vmax.f32 %v157, %v182
    %v184 = vrot.slane %v183, 2
    %v185 = vmax.f32 %v183, %v184
    %v186 = vrot.slane %v185, 1
    %v187 = vmax.f32 %v185, %v186
    %v188 = vld [vmem:[#allocation3] sm:$0x1]
    %v189 = vmax.f32 %v188, %v187
    %v190 = vrot.slane %v159, 4
    %v191 = vmax.f32 %v159, %v190
    %v192 = vrot.slane %v191, 2
    %v193 = vmax.f32 %v191, %v192
    %v194 = vrot.slane %v193, 1
    %v195 = vmax.f32 %v193, %v194
    %v196 = vsub.f32 %v159, %v195
    %v197 = vmul.f32 %v196, 1.442695
    %v198 = vpow.pop %v197
    %v199 = vmul.f32 %v162, %v198
    %v200 = vsel %vm156, %v199, 0.0
    %v201 = vrot.slane %v200, 4
    %v202 = vadd.f32 %v200, %v201
    %v203 = vrot.slane %v202, 2
    %v204 = vadd.f32 %v202, %v203
    %v205 = vrot.slane %v204, 1
    %v206 = vadd.f32 %v204, %v205
    %v207 = vsub.f32 %v195, %v189
    %v208 = vmin.f32 %v207, 80.0
    %v209 = vmul.f32 %v208, 1.442695
    %v210 = vpow.pop %v209
    %v211 = vld [vmem:[#allocation4] sm:$0x1]
    %v212 = vsub.f32 %v188, %v189
    %v213 = vmul.f32 %v212, 1.442695
    %v214 = vpow.pop %v213
    %v215 = vmul.f32 %v211, %v214
    %v216 = vmul.f32 %v206, %v210
    %v217 = vadd.f32 %v215, %v216
    %vm218 = vcmask 57344
    %219 = vst.msk [vmem:[#allocation4] sm:$0x1] %vm218, %v217
    %220 = vst.msk [vmem:[#allocation3] sm:$0x1] %vm218, %v189
    %v221 = vld [vmem:[#allocation5] sm:$0x1]
    %v222 = vmul.f32 %v135, %v155
    %v223 = vsel %vm156, %v222, 0.0
    %v224 = vrot.slane %v223, 4
    %v225 = vadd.f32 %v223, %v224
    %v226 = vrot.slane %v225, 2
    %v227 = vadd.f32 %v225, %v226
    %v228 = vrot.slane %v227, 1
    %v229 = vadd.f32 %v227, %v228
    %v230 = vadd.f32 %v221, %v229
    %231 = vst.msk [vmem:[#allocation5] sm:$0x1] %vm218, %v230
    %vm232 = vcmask 130112
    %v233 = vsel %vm232, %v135, -inf
    %234 = vmax.xlane.f32.xlu0 %v233
    %v235 = vpop.xlane.xlu0 %234
    %v236 = vsub.f32 %v135, %v235
    %v237 = vmul.f32 %v236, 1.442695
    %v238 = vpow.pop %v237
    %240 = vrot.lane.b32.xlu0 %v238, 120
    %v241 = vpop.permute.xlu0 %240
    %v243 = vsel %vm156, %v241, 0.0
    %244 = vadd.xlane.f32.xlu0 %v243
    %v245 = vpop.xlane.xlu0 %244
    %v246 = vlog2.pop %v245
    %v247 = vmul.f32 %v246, 0.6931472
    %v248 = vadd.f32 %v235, %v247
    %250 = vrot.lane.b32.xlu0 %v151, 8
    %v251 = vpop.permute.xlu0 %250
    %v253 = vmul.f32 %v135, %v251
    %255 = vrot.lane.b32.xlu0 %v253, 120
    %v256 = vpop.permute.xlu0 %255
    %v258 = vsel %vm156, %v256, 0.0
    %259 = vadd.xlane.f32.xlu0 %v258
    %v260 = vpop.xlane.xlu0 %259
    %v261 = vsub.f32 %v248, %v260
    %v262 = vadd.f32 %v261, 0.0
    %v263 = vrot.slane %v262, 4
    %v264 = vadd.f32 %v262, %v263
    %v265 = vrot.slane %v264, 2
    %v266 = vadd.f32 %v264, %v265
    %v267 = vrot.slane %v266, 1
    %v268 = vadd.f32 %v266, %v267
    %v269 = vadd.f32 %v181, %v268
    %v270 = vrot.slane %v233, 4
    %v271 = vmax.f32 %v233, %v270
    %v272 = vrot.slane %v271, 2
    %v273 = vmax.f32 %v271, %v272
    %v274 = vrot.slane %v273, 1
    %v275 = vmax.f32 %v273, %v274
    %v276 = vld [vmem:[#allocation6] sm:$0x1]
    %278 = vrot.lane.b32.xlu0 %v275, 120
    %v279 = vpop.permute.xlu0 %278
    %v281 = vmax.f32 %v276, %v279
    %v282 = vrot.slane %v235, 4
    %v283 = vmax.f32 %v235, %v282
    %v284 = vrot.slane %v283, 2
    %v285 = vmax.f32 %v283, %v284
    %v286 = vrot.slane %v285, 1
    %v287 = vmax.f32 %v285, %v286
    %v288 = vsub.f32 %v235, %v287
    %v289 = vmul.f32 %v288, 1.442695
    %v290 = vpow.pop %v289
    %v291 = vmul.f32 %v238, %v290
    %v292 = vsel %vm232, %v291, 0.0
    %v293 = vrot.slane %v292, 4
    %v294 = vadd.f32 %v292, %v293
    %v295 = vrot.slane %v294, 2
    %v296 = vadd.f32 %v294, %v295
    %v297 = vrot.slane %v296, 1
    %v298 = vadd.f32 %v296, %v297
    %v299 = vsub.f32 %v287, %v281
    %v300 = vmin.f32 %v299, 80.0
    %v301 = vmul.f32 %v300, 1.442695
    %v302 = vpow.pop %v301
    %v303 = vld [vmem:[#allocation7] sm:$0x1]
    %v304 = vsub.f32 %v276, %v281
    %v305 = vmul.f32 %v304, 1.442695
    %v306 = vpow.pop %v305
    %v307 = vmul.f32 %v303, %v306
    %v309 = vperm.slane %v302, 0
    %310 = vrot.lane.b32.xlu0 %v309, 8
    %v311 = vpop.permute.xlu0 %310
    %v313 = vmul.f32 %v298, %v311
    %315 = vrot.lane.b32.xlu0 %v313, 120
    %v316 = vpop.permute.xlu0 %315
    %v318 = vadd.f32 %v307, %v316
    %319 = vst.msk [vmem:[#allocation7] sm:$0x1] %vm218, %v318
    %320 = vst.msk [vmem:[#allocation6] sm:$0x1] %vm218, %v281
    %v321 = vld [vmem:[#allocation8] sm:$0x1]
    %323 = vrot.lane.b32.xlu0 %v155, 8
    %v324 = vpop.permute.xlu0 %323
    %v326 = vmul.f32 %v135, %v324
    %v327 = vsel %vm232, %v326, 0.0
    %v328 = vrot.slane %v327, 4
    %v329 = vadd.f32 %v327, %v328
    %v330 = vrot.slane %v329, 2
    %v331 = vadd.f32 %v329, %v330
    %v332 = vrot.slane %v331, 1
    %v333 = vadd.f32 %v331, %v332
    %335 = vrot.lane.b32.xlu0 %v333, 120
    %v336 = vpop.permute.xlu0 %335
    %v338 = vadd.f32 %v321, %v336
    %339 = vst.msk [vmem:[#allocation8] sm:$0x1] %vm218, %v338
    %v340 = vld [vmem:[#allocation9] sm:$0x1]
    %v341 = vadd.f32 %v340, %v269
    %vm342 = vcmask 0
    %343 = vst.msk [vmem:[#allocation9] sm:$0x1] %vm342, %v341
    // Predicated region
    $region30: #{tpu_custom_call.1} parent=1 // pred_check
      %p344 = pneg %p38
    $region31: #{tpu_custom_call.1} parent=1 // pred_check_branch
      %346 = sbr.rel (%p344) target = $region33
    $region32: #{tpu_custom_call.1} parent=1 // pred_region
      %v347 = vld [vmem:[#allocation9] sm:$0x1]
      %v348 = vld [vmem:[#allocation3] sm:$0x1]
      %v349 = vld [vmem:[#allocation4] sm:$0x1]
      %v350 = vmax.f32 %v349, 1.0
      %v351 = vlog2.pop %v350
      %v352 = vmul.f32 %v351, 0.6931472
      %v353 = vadd.f32 %v348, %v352
      %v354 = vld [vmem:[#allocation5] sm:$0x1]
      %v355 = vsub.f32 %v353, %v354
      %v356 = vsel %vm218, %v355, 0.0
      %357 = vadd.xlane.f32.xlu0 %v356
      %v358 = vpop.xlane.xlu0 %357
      %v359 = vadd.f32 %v358, 0.0
      %v360 = vadd.f32 %v347, %v359
      %v361 = vld [vmem:[#allocation6] sm:$0x1]
      %v362 = vld [vmem:[#allocation7] sm:$0x1]
      %v363 = vmax.f32 %v362, 1.0
      %v364 = vlog2.pop %v363
      %v365 = vmul.f32 %v364, 0.6931472
      %v366 = vadd.f32 %v361, %v365
      %v367 = vld [vmem:[#allocation8] sm:$0x1]
      %v368 = vsub.f32 %v366, %v367
      %v369 = vsel %vm218, %v368, 0.0
      %370 = vadd.xlane.f32.xlu0 %v369
      %v371 = vpop.xlane.xlu0 %370
      %v372 = vadd.f32 %v371, 0.0
      %v373 = vadd.f32 %v360, %v372
      %v374 = vmul.f32 %v373, 0.0625
      %375 = vst.msk [vmem:[#allocation14] sm:$0x1] %vm342, %v374
    $region33: #{tpu_custom_call.1} parent=1 // pred_fallthru
      _
    // Predicated region
    $region34: #{tpu_custom_call.1} parent=1 // pred_check
      _
    $region35: #{tpu_custom_call.1} parent=1 // pred_check_branch
      %377 = sbr.rel (0) target = $region37
    $region36: #{tpu_custom_call.1} parent=1 // pred_region
      %379 = vsyncadd [#allocation13], 0
      %s381 = sshll.u32 [#allocation14], 4
      %s382 = int_to_ptr.vmem [resolvable:$true] %s381
      %s383 = sshll.u32 %s5, 4
      %s384 = int_to_ptr.hbm [resolvable:$true] %s383
      %386 = dma.vmem_to_hbm [thread:$0]  %s382, 16, %s384, [#allocation13]
    $region37: #{tpu_custom_call.1} parent=1 // pred_fallthru
      _
    // Predicated region
    $region38: #{tpu_custom_call.1} parent=1 // pred_check
      _
    $region39: #{tpu_custom_call.1} parent=1 // pred_check_branch
      %388 = sbr.rel (0) target = $region41
    $region40: #{tpu_custom_call.1} parent=1 // pred_region
      %390 = dma.done [#allocation13], 16
    $region41: #{tpu_custom_call.1} parent=1 // pred_fallthru
      _
    %391 = vsyncpa [#allocation12], 1
    %392 = vsyncpa [#allocation13], 1

</llo_original>
